<compile_context>
chip_gen: v7x
topology: tpu7x:2x2x1
jax: 0.10.0
libtpu: 0.0.40
codegen_flags: <defaults>
</compile_context>

<pallas_src>
import functools
import math

import jax
import jax.numpy as jnp
from jax.experimental import pallas as pl
from jax.experimental.pallas import tpu as pltpu


# Dispatch / tiling policy for a pure HBM-roofline pad/memcpy kernel.
_TARGET_BLOCK_BYTES = 8 << 20   # ~8 MiB of (in+out) per grid step
_MAX_BLOCK_BYTES = 12 << 20     # 2x-buffered footprint stays ~<=24 MiB (v7x-safe)
_MIN_LANE_DIM = 128             # lane-sparse outputs -> XLA native pad
_VMEM_SLACK_BYTES = 2 << 20


def _int_to_lr(i: int):
    # identical to CausalPad.int_to_lr
    return (i, 0) if i >= 0 else (0, abs(i))


def _xla_pad(x, lead_rank, left, right, value):
    pad_widths = [(0, 0)] * lead_rank + list(zip(left, right))
    return jnp.pad(x, pad_widths, mode="constant", constant_values=value)


def _make_pad_kernel(left, right, trail_in, value):
    """Kernel over a block shaped (row_block, *trail_out):
       1) copy the input block into the statically-offset interior window
       2) fill ONLY the pad slivers with `value` (corner overlap is negligible).
       o_ref is never read, so there is no dependence on its prior contents."""
    k = len(trail_in)
    nd = 1 + k  # (row_block, *trailing)

    def kernel(x_ref, o_ref):
        dtype = o_ref.dtype

        # 1) interior copy (single store of the input bytes)
        interior = (slice(None),) + tuple(
            slice(l, l + s) for l, s in zip(left, trail_in)
        )
        o_ref[interior] = x_ref[...]

        # 2) pad slivers only — never read o_ref, never refill the interior
        out_blk = o_ref.shape
        for j in range(k):
            d = 1 + j
            if left[j] > 0:
                idx = tuple(
                    slice(0, left[j]) if a == d else slice(None) for a in range(nd)
                )
                shp = tuple(left[j] if a == d else out_blk[a] for a in range(nd))
                o_ref[idx] = jnp.full(shp, value, dtype)
            if right[j] > 0:
                start = left[j] + trail_in[j]
                idx = tuple(
                    slice(start, start + right[j]) if a == d else slice(None)
                    for a in range(nd)
                )
                shp = tuple(right[j] if a == d else out_blk[a] for a in range(nd))
                o_ref[idx] = jnp.full(shp, value, dtype)

    return kernel


@functools.partial(jax.jit, static_argnames=("pad", "value", "min_pallas_bytes"))
def causal_pad(x, pad, value: float = 0.0, min_pallas_bytes: int = 256 * 1024):
    """Pallas implementation of CausalPad(pad).forward(x)."""
    ndim = x.ndim
    k = len(pad)
    assert k <= ndim, "pad tuple longer than input rank"
    if k == 0:
        return x

    # Per trailing dim (left, right) padding, matching the PyTorch module.
    left, right = [], []
    for p in pad:
        l, r = _int_to_lr(p)
        left.append(l)
        right.append(r)

    # Fold leading (0, 0) pad entries into the unpadded lead axes.
    while left and left[0] == 0 and right[0] == 0:
        left.pop(0)
        right.pop(0)
    k = len(left)
    if k == 0:
        return x
    left, right = tuple(left), tuple(right)

    lead_shape = x.shape[: ndim - k]
    trail_in = x.shape[ndim - k:]
    trail_out = tuple(s + l + r for s, l, r in zip(trail_in, left, right))
    out_shape = lead_shape + trail_out

    itemsize = jnp.dtype(x.dtype).itemsize
    in_bytes = x.size * itemsize
    out_bytes = math.prod(out_shape) * itemsize

    # Fast paths handled as well or better by XLA's native pad:
    #  * tiny tensors (pallas_call fixed overhead dominates)
    #  * lane-sparse outputs (last dim < 128 -> masked vst.msk partial stores)
    if (in_bytes + out_bytes < min_pallas_bytes) or (trail_out[-1] < _MIN_LANE_DIM):
        return _xla_pad(x, ndim - k, left, right, value)

    # Collapse unpadded leading dims into one "row" axis so we can tile it.
    L = math.prod(lead_shape) if lead_shape else 1
    x2 = x.reshape((L,) + trail_in)

    in_row = math.prod(trail_in) * itemsize
    out_row = math.prod(trail_out) * itemsize
    per_row = in_row + out_row

    # Guard: a single row exceeding the per-block VMEM budget cannot be tiled
    # by the row-only grid (trailing dims are not tiled) -> XLA pad.
    if per_row > _MAX_BLOCK_BYTES:
        return _xla_pad(x, ndim - k, left, right, value)

    # Rows per block: ~8 MiB of (in+out) per grid step amortizes the ~0.35 us
    # per-step overhead; double-buffered footprint stays <= ~24 MiB, inside
    # v7x's 32 MiB scoped / 64 MiB physical VMEM (and the explicit limit below
    # covers v5e's 16 MiB scoped default).
    rb = max(1, min(_TARGET_BLOCK_BYTES // per_row, L))
    if L >= 16:
        # keep >= 2 grid steps so dimension_semantics=("parallel",) can shard
        # the grid across v7x's 2 TensorCores
        rb = min(rb, -(-L // 2))
    if k == 1 and rb < L:
        # row axis sits in the sublane (second-to-last) block dim: must be a
        # multiple of 8 or equal to the full extent
        rb = max(8, (rb // 8) * 8) if L >= 8 else L
    if rb * per_row > _MAX_BLOCK_BYTES:
        # layout constraints pushed the block past the VMEM budget
        return _xla_pad(x, ndim - k, left, right, value)

    in_blk = rb * in_row
    out_blk = rb * out_row
    vmem_limit = int(max(32 << 20, 2 * (in_blk + out_blk) + _VMEM_SLACK_BYTES))

    grid = (pl.cdiv(L, rb),)
    in_spec = pl.BlockSpec((rb,) + trail_in, lambda i: (i,) + (0,) * k)
    out_spec = pl.BlockSpec((rb,) + trail_out, lambda i: (i,) + (0,) * k)

    kernel = _make_pad_kernel(left, right, trail_in, value)

    y2 = pl.pallas_call(
        kernel,
        out_shape=jax.ShapeDtypeStruct((L,) + trail_out, x.dtype),
        grid=grid,
        in_specs=[in_spec],
        out_specs=out_spec,
        compiler_params=pltpu.CompilerParams(
            # each grid point writes a distinct output block -> shard across
            # TensorCores on v7x; harmless no-op on v5e/v6e
            dimension_semantics=("parallel",),
            vmem_limit_bytes=vmem_limit,
        ),
        cost_estimate=pl.CostEstimate(
            flops=0, transcendentals=0, bytes_accessed=in_bytes + out_bytes
        ),
    )(x2)

    return y2.reshape(out_shape)


if __name__ == "__main__":
    key = jax.random.PRNGKey(0)

    # 1) NCHW with lane-dense output last dim (>=128); Pallas path forced.
    #    H gets 2 zeros on the left (causal), W gets 3 zeros on the right.
    x = jax.random.normal(key, (2, 4, 16, 128), dtype=jnp.float32)
    out = jax.block_until_ready(causal_pad(x, (2, -3), min_pallas_bytes=0))
    ref = jnp.pad(x, ((0, 0), (0, 0), (2, 0), (0, 3)))
    assert out.shape == ref.shape and out.dtype == ref.dtype
    assert jnp.allclose(out, ref), "mismatch vs jnp.pad reference (4D)"

    # 2) Pure-causal 1D-style pad on an NCW tensor, pad = (3,) — k == 1 path
    #    where the collapsed row axis sits in the sublane block dim.
    x1 = jax.random.normal(jax.random.PRNGKey(1), (2, 4, 256), dtype=jnp.float32)
    out1 = jax.block_until_ready(causal_pad(x1, (3,), min_pallas_bytes=0))
    ref1 = jnp.pad(x1, ((0, 0), (0, 0), (3, 0)))
    assert out1.shape == ref1.shape and jnp.allclose(out1, ref1)

    # 3) Larger case exercising the multi-step (grid >= 2) pipelined path.
    x2 = jax.random.normal(jax.random.PRNGKey(2), (2, 8, 64, 256), dtype=jnp.float32)
    out2 = jax.block_until_ready(causal_pad(x2, (4, -5)))
    ref2 = jnp.pad(x2, ((0, 0), (0, 0), (4, 0), (0, 5)))
    assert out2.shape == ref2.shape and jnp.allclose(out2, ref2)

    # 4) Leading (0,0) pad entry is folded into the row axis (k collapses 2->1).
    x3 = jax.random.normal(jax.random.PRNGKey(3), (2, 4, 16, 128), dtype=jnp.float32)
    out3 = jax.block_until_ready(causal_pad(x3, (0, 2), min_pallas_bytes=0))
    ref3 = jnp.pad(x3, ((0, 0), (0, 0), (0, 0), (2, 0)))
    assert out3.shape == ref3.shape and jnp.allclose(out3, ref3)

    # 5) Lane-sparse output (last dim < 128) dispatches to XLA pad by design.
    x4 = jax.random.normal(jax.random.PRNGKey(4), (2, 4, 16, 16), dtype=jnp.float32)
    out4 = jax.block_until_ready(causal_pad(x4, (2, -3), min_pallas_bytes=0))
    assert jnp.allclose(out4, jnp.pad(x4, ((0, 0), (0, 0), (2, 0), (0, 3))))

    # 6) Tiny-tensor fast path (dispatches to XLA pad by design).
    x5 = jax.random.normal(jax.random.PRNGKey(5), (2, 4, 8), dtype=jnp.float32)
    out5 = jax.block_until_ready(causal_pad(x5, (2,)))
    assert jnp.allclose(out5, jnp.pad(x5, ((0, 0), (0, 0), (2, 0))))

    print("KERNEL_OK")
</pallas_src>

<mosaic_0001>
module attributes {stable_mosaic.version = 11 : i64} {
  func.func @kernel(%arg0: i32, %arg1: memref<8x16x128xf32, #tpu.memory_space<vmem>>, %arg2: memref<8x18x131xf32, #tpu.memory_space<vmem>>) attributes {dimension_semantics = [#tpu.dimension_semantics<parallel>], iteration_bounds = array<i64: 1>, scalar_prefetch = 0 : i64, scratch_operands = 0 : i64, tpu.core_type = #tpu.core_type<tc>, window_params = [{transform_indices = @transform_0, window_bounds = array<i64: 8, 16, 128>}, {transform_indices = @transform_1, window_bounds = array<i64: 8, 18, 131>}]} {
    %c0 = arith.constant 0 : index
    %c0_0 = arith.constant 0 : index
    %c0_1 = arith.constant 0 : index
    %0 = vector.load %arg1[%c0, %c0_0, %c0_1] : memref<8x16x128xf32, #tpu.memory_space<vmem>>, vector<8x16x128xf32>
    %c0_2 = arith.constant 0 : index
    %c2 = arith.constant 2 : index
    %c0_3 = arith.constant 0 : index
    %1 = vector.load %arg2[%c0_2, %c2, %c0_3] : memref<8x18x131xf32, #tpu.memory_space<vmem>>, vector<8x16x128xf32>
    tpu.vector_store %arg2[%c0_2, %c2, %c0_3], %0 {strides = array<i32>} : memref<8x18x131xf32, #tpu.memory_space<vmem>>, vector<8x16x128xf32>,
    %cst = arith.constant 0.000000e+00 : f32
    %2 = vector.broadcast %cst : f32 to vector<8x2x131xf32>
    %c0_4 = arith.constant 0 : index
    %c0_5 = arith.constant 0 : index
    %c0_6 = arith.constant 0 : index
    %3 = vector.load %arg2[%c0_4, %c0_5, %c0_6] : memref<8x18x131xf32, #tpu.memory_space<vmem>>, vector<8x2x131xf32>
    tpu.vector_store %arg2[%c0_4, %c0_5, %c0_6], %2 {strides = array<i32>} : memref<8x18x131xf32, #tpu.memory_space<vmem>>, vector<8x2x131xf32>,
    %cst_7 = arith.constant 0.000000e+00 : f32
    %4 = vector.broadcast %cst_7 : f32 to vector<8x18x3xf32>
    %c0_8 = arith.constant 0 : index
    %c0_9 = arith.constant 0 : index
    %c128 = arith.constant 128 : index
    %5 = vector.load %arg2[%c0_8, %c0_9, %c128] : memref<8x18x131xf32, #tpu.memory_space<vmem>>, vector<8x18x3xf32>
    tpu.vector_store %arg2[%c0_8, %c0_9, %c128], %4 {strides = array<i32>} : memref<8x18x131xf32, #tpu.memory_space<vmem>>, vector<8x18x3xf32>,
    return
  }
  func.func @transform_0(%arg0: i32) -> (i32, i32, i32) {
    %c0_i32 = arith.constant 0 : i32
    %c0_i32_0 = arith.constant 0 : i32
    %c0_i32_1 = arith.constant 0 : i32
    return %arg0, %c0_i32, %c0_i32_0 : i32, i32, i32
  }
  func.func @transform_1(%arg0: i32) -> (i32, i32, i32) {
    %c0_i32 = arith.constant 0 : i32
    %c0_i32_0 = arith.constant 0 : i32
    %c0_i32_1 = arith.constant 0 : i32
    return %arg0, %c0_i32, %c0_i32_0 : i32, i32, i32
  }
}

</mosaic_0001>

<llo_original>
// kernel: causal_pad.1
$region0: #{causal_pad.1}
  #allocation0 [shape = 'u32[]', space=smem, size = 0x4, offset = 0x4, fixed_abs, tag = 'smem constant byte address 0x4 - core index']
  #allocation1 [shape = 'u32[144,128]{1,0:T(1,128)}', space=vmem, size = 0x12000, scoped, tag = 'internal scratch']
  %s0 = inlined_call_operand.hbm [shape: f32[8,16,128], index: 0, kind: input, shape index: {}]
  %s1 = inlined_call_operand.vmem [shape: f32[8,18,131], index: 1, kind: output, shape index: {}]
  %s2 = sld [smem:[#allocation0]]
  $region18: #{causal_pad.1} parent=0
    _
  %s4 = ssub.s32 1, %s2
  %s5 = scalar_select 0, %s4, %s2
  $region1: #{causal_pad.1} parent=0
    #allocation2 [shape = 'u8[65536]{0}', space=vmem, size = 0x10000, scoped, tag = 'input window, operand 0, single buffered']
    #allocation3 [shape = 's32[1]{0}', space=sflag, size = 0x4, scoped, tag = 'scoped memory for causal_pad.1']
    %6 = vsyncpa [#allocation3], 0
    // Predicated region
    $region2: #{causal_pad.1} parent=1 // pred_check
      _
    $region3: #{causal_pad.1} parent=1 // pred_check_branch
      %8 = sbr.rel (0) target = $region5
    $region4: #{causal_pad.1} parent=1 // pred_region
      %s10 = ssub.s32 2048, 2048
      %11 = vsyncadd [#allocation3], %s10
      %s12 = sshll.u32 [#allocation2], 4
      %s13 = int_to_ptr.vmem [resolvable:$true] %s12
      %18 = dma.hbm_to_vmem [thread:$0]  %s0, 2048, %s13, [#allocation3], 128, 128, 8
    $region5: #{causal_pad.1} parent=1 // pred_fallthru
      _
    // Predicated region
    $region6: #{causal_pad.1} parent=1 // pred_check
      _
    $region7: #{causal_pad.1} parent=1 // pred_check_branch
      %20 = sbr.rel (0) target = $region9
    $region8: #{causal_pad.1} parent=1 // pred_region
      %21 = dma.done [#allocation3], 2048
    $region9: #{causal_pad.1} parent=1 // pred_fallthru
      _
    %v22 = vld [vmem:[#allocation2] sm:$0xff]
    %v23 = vld [vmem:[#allocation2 + $0x8] sm:$0xff]
    %v24 = vld [vmem:[#allocation2 + $0x10] sm:$0xff]
    %v25 = vld [vmem:[#allocation2 + $0x18] sm:$0xff]
    %v26 = vld [vmem:[#allocation2 + $0x20] sm:$0xff]
    %v27 = vld [vmem:[#allocation2 + $0x28] sm:$0xff]
    %v28 = vld [vmem:[#allocation2 + $0x30] sm:$0xff]
    %v29 = vld [vmem:[#allocation2 + $0x38] sm:$0xff]
    %v30 = vld [vmem:[#allocation2 + $0x40] sm:$0xff]
    %v31 = vld [vmem:[#allocation2 + $0x48] sm:$0xff]
    %v32 = vld [vmem:[#allocation2 + $0x50] sm:$0xff]
    %v33 = vld [vmem:[#allocation2 + $0x58] sm:$0xff]
    %v34 = vld [vmem:[#allocation2 + $0x60] sm:$0xff]
    %v35 = vld [vmem:[#allocation2 + $0x68] sm:$0xff]
    %v36 = vld [vmem:[#allocation2 + $0x70] sm:$0xff]
    %v37 = vld [vmem:[#allocation2 + $0x78] sm:$0xff]
    %vm54 = vcmask 1041408
    %v55 = vrot.slane %v22, 6
    %v56 = vrot.slane %v23, 6
    %v57 = vsel %vm54, %v55, %v56
    %v58 = vrot.slane %v24, 6
    %v59 = vrot.slane %v25, 6
    %v60 = vsel %vm54, %v58, %v59
    %v61 = vrot.slane %v26, 6
    %v62 = vrot.slane %v27, 6
    %v63 = vsel %vm54, %v61, %v62
    %v64 = vrot.slane %v28, 6
    %v65 = vrot.slane %v29, 6
    %v66 = vsel %vm54, %v64, %v65
    %v67 = vrot.slane %v30, 6
    %v68 = vrot.slane %v31, 6
    %v69 = vsel %vm54, %v67, %v68
    %v70 = vrot.slane %v32, 6
    %v71 = vrot.slane %v33, 6
    %v72 = vsel %vm54, %v70, %v71
    %v73 = vrot.slane %v34, 6
    %v74 = vrot.slane %v35, 6
    %v75 = vsel %vm54, %v73, %v74
    %v76 = vrot.slane %v36, 6
    %v77 = vrot.slane %v37, 6
    %v78 = vsel %vm54, %v76, %v77
    %103 = vst [vmem:[%s1] sm:$0xfc] %v55
    %104 = vst [vmem:[%s1 + $0x10] sm:$0xff] %v57
    %105 = vst [vmem:[%s1 + $0x20] sm:$0x3] %v56
    %106 = vst [vmem:[%s1 + $0x30] sm:$0xfc] %v58
    %107 = vst [vmem:[%s1 + $0x40] sm:$0xff] %v60
    %108 = vst [vmem:[%s1 + $0x50] sm:$0x3] %v59
    %109 = vst [vmem:[%s1 + $0x60] sm:$0xfc] %v61
    %110 = vst [vmem:[%s1 + $0x70] sm:$0xff] %v63
    %111 = vst [vmem:[%s1 + $0x80] sm:$0x3] %v62
    %112 = vst [vmem:[%s1 + $0x90] sm:$0xfc] %v64
    %113 = vst [vmem:[%s1 + $0xa0] sm:$0xff] %v66
    %114 = vst [vmem:[%s1 + $0xb0] sm:$0x3] %v65
    %115 = vst [vmem:[%s1 + $0xc0] sm:$0xfc] %v67
    %116 = vst [vmem:[%s1 + $0xd0] sm:$0xff] %v69
    %117 = vst [vmem:[%s1 + $0xe0] sm:$0x3] %v68
    %118 = vst [vmem:[%s1 + $0xf0] sm:$0xfc] %v70
    %119 = vst [vmem:[%s1 + $0x100] sm:$0xff] %v72
    %120 = vst [vmem:[%s1 + $0x110] sm:$0x3] %v71
    %121 = vst [vmem:[%s1 + $0x120] sm:$0xfc] %v73
    %122 = vst [vmem:[%s1 + $0x130] sm:$0xff] %v75
    %123 = vst [vmem:[%s1 + $0x140] sm:$0x3] %v74
    %124 = vst [vmem:[%s1 + $0x150] sm:$0xfc] %v76
    %125 = vst [vmem:[%s1 + $0x160] sm:$0xff] %v78
    %126 = vst [vmem:[%s1 + $0x170] sm:$0x3] %v77
    %127 = vst [vmem:[%s1] sm:$0x3] 0.0
    %vm128 = vcmask 17408
    %129 = vst.msk [vmem:[%s1 + $0x8] sm:$0x3] %vm128, 0.0
    %130 = vst [vmem:[%s1 + $0x30] sm:$0x3] 0.0
    %131 = vst.msk [vmem:[%s1 + $0x38] sm:$0x3] %vm128, 0.0
    %132 = vst [vmem:[%s1 + $0x60] sm:$0x3] 0.0
    %133 = vst.msk [vmem:[%s1 + $0x68] sm:$0x3] %vm128, 0.0
    %134 = vst [vmem:[%s1 + $0x90] sm:$0x3] 0.0
    %135 = vst.msk [vmem:[%s1 + $0x98] sm:$0x3] %vm128, 0.0
    %136 = vst [vmem:[%s1 + $0xc0] sm:$0x3] 0.0
    %137 = vst.msk [vmem:[%s1 + $0xc8] sm:$0x3] %vm128, 0.0
    %138 = vst [vmem:[%s1 + $0xf0] sm:$0x3] 0.0
    %139 = vst.msk [vmem:[%s1 + $0xf8] sm:$0x3] %vm128, 0.0
    %140 = vst [vmem:[%s1 + $0x120] sm:$0x3] 0.0
    %141 = vst.msk [vmem:[%s1 + $0x128] sm:$0x3] %vm128, 0.0
    %142 = vst [vmem:[%s1 + $0x150] sm:$0x3] 0.0
    %143 = vst.msk [vmem:[%s1 + $0x158] sm:$0x3] %vm128, 0.0
    %vm144 = vcmask 23552
    %145 = vst.msk [vmem:[%s1 + $0x8] sm:$0xff] %vm144, 0.0
    %146 = vst.msk [vmem:[%s1 + $0x18] sm:$0xff] %vm144, 0.0
    %147 = vst.msk [vmem:[%s1 + $0x28] sm:$0x3] %vm128, 0.0
    %148 = vst.msk [vmem:[%s1 + $0x38] sm:$0xff] %vm144, 0.0
    %149 = vst.msk [vmem:[%s1 + $0x48] sm:$0xff] %vm144, 0.0
    %150 = vst.msk [vmem:[%s1 + $0x58] sm:$0x3] %vm128, 0.0
    %151 = vst.msk [vmem:[%s1 + $0x68] sm:$0xff] %vm144, 0.0
    %152 = vst.msk [vmem:[%s1 + $0x78] sm:$0xff] %vm144, 0.0
    %153 = vst.msk [vmem:[%s1 + $0x88] sm:$0x3] %vm128, 0.0
    %154 = vst.msk [vmem:[%s1 + $0x98] sm:$0xff] %vm144, 0.0
    %155 = vst.msk [vmem:[%s1 + $0xa8] sm:$0xff] %vm144, 0.0
    %156 = vst.msk [vmem:[%s1 + $0xb8] sm:$0x3] %vm128, 0.0
    %157 = vst.msk [vmem:[%s1 + $0xc8] sm:$0xff] %vm144, 0.0
    %158 = vst.msk [vmem:[%s1 + $0xd8] sm:$0xff] %vm144, 0.0
    %159 = vst.msk [vmem:[%s1 + $0xe8] sm:$0x3] %vm128, 0.0
    %160 = vst.msk [vmem:[%s1 + $0xf8] sm:$0xff] %vm144, 0.0
    %161 = vst.msk [vmem:[%s1 + $0x108] sm:$0xff] %vm144, 0.0
    %162 = vst.msk [vmem:[%s1 + $0x118] sm:$0x3] %vm128, 0.0
    %163 = vst.msk [vmem:[%s1 + $0x128] sm:$0xff] %vm144, 0.0
    %164 = vst.msk [vmem:[%s1 + $0x138] sm:$0xff] %vm144, 0.0
    %165 = vst.msk [vmem:[%s1 + $0x148] sm:$0x3] %vm128, 0.0
    %166 = vst.msk [vmem:[%s1 + $0x158] sm:$0xff] %vm144, 0.0
    %167 = vst.msk [vmem:[%s1 + $0x168] sm:$0xff] %vm144, 0.0
    %168 = vst.msk [vmem:[%s1 + $0x178] sm:$0x3] %vm128, 0.0
    // Predicated region
    $region10: #{causal_pad.1} parent=1 // pred_check
      _
    $region11: #{causal_pad.1} parent=1 // pred_check_branch
      %170 = sbr.rel (0) target = $region13
    $region12: #{causal_pad.1} parent=1 // pred_region
      _
    $region13: #{causal_pad.1} parent=1 // pred_fallthru
      _
    // Predicated region
    $region14: #{causal_pad.1} parent=1 // pred_check
      _
    $region15: #{causal_pad.1} parent=1 // pred_check_branch
      %172 = sbr.rel (0) target = $region17
    $region16: #{causal_pad.1} parent=1 // pred_region
      _
    $region17: #{causal_pad.1} parent=1 // pred_fallthru
      _
    %173 = vsyncpa [#allocation3], 1

</llo_original>
